<compile_context>
chip_gen: v7x
topology: tpu7x:2x2x1
jax: 0.10.0
libtpu: 0.0.40
codegen_flags: <defaults>
</compile_context>

<pallas_src>
import functools

import jax
import jax.numpy as jnp
from jax.experimental import pallas as pl
from jax.experimental.pallas import tpu as pltpu


def _concat_conv_kernel(x_ref, w_ref, b_ref, o_ref, *, taps, wp, dilation, l_out):
    """Fused im2col + GEMM for one batch element.

    x_ref: (1, Cin, Lp)        bf16 spatially-flattened (tail-padded) image
    w_ref: (KH*KW, Cout, Cin)  bf16 per-tap weight matrices
    b_ref: (Cout, 1)           f32 (time-folded) bias
    o_ref: (1, Cout, L_out)    dense conv output; lane axis = flattened space
    """
    acc = None
    for idx, (kh, kw) in enumerate(taps):
        off = dilation * (kh * wp + kw)
        x_tap = x_ref[0, :, off:off + l_out]                    # (Cin, L_out)
        part = jnp.dot(w_ref[idx], x_tap,
                       preferred_element_type=jnp.float32)      # (Cout, L_out) f32
        acc = part if acc is None else acc + part
    acc = acc + b_ref[...]                                      # bias bcast over lanes
    o_ref[...] = acc[None].astype(o_ref.dtype)


def concat_conv2d(t, x, weight, bias, *, stride=1, padding=0, dilation=1):
    """ConcatConv2d forward.

    t:      scalar (float)
    x:      (N, C, H, W)  float32, NCHW
    weight: (Cout, C+1, KH, KW)  torch Conv2d OIHW layout
    bias:   (Cout,)
    returns (N, Cout, Ho, Wo) NCHW
    """
    # TODO(synk): transpose=True (ConvTranspose2d) and groups > 1 not implemented.
    N, C, H, W = x.shape
    Cout, Cin_w, KH, KW = weight.shape
    assert Cin_w == C + 1

    if padding == 0:
        # Constant time channel -> fold into bias (exact for 'VALID' conv).
        x_in = x
        w_used = weight[:, 1:]                                   # (Cout, C, KH, KW)
        bias_eff = bias + t * jnp.sum(weight[:, 0], axis=(1, 2))
    else:
        # Zero-padding breaks constancy of the time channel: keep it explicit.
        tt = jnp.full((N, 1, H, W), t, dtype=x.dtype)
        x_in = jnp.concatenate([tt, x], axis=1)
        w_used = weight
        bias_eff = bias
        x_in = jnp.pad(x_in, ((0, 0), (0, 0),
                              (padding, padding), (padding, padding)))

    Cin = x_in.shape[1]
    Hp, Wp = x_in.shape[2], x_in.shape[3]
    Hv = Hp - dilation * (KH - 1)            # dense (stride-1) output rows
    Wv = Wp - dilation * (KW - 1)            # dense (stride-1) output cols
    assert Hv > 0 and Wv > 0, "kernel does not fit in the (padded) input"
    Ho = (Hv - 1) // stride + 1
    Wo = (Wv - 1) // stride + 1

    # Dense output: Hv rows of the padded width Wp (garbage cols w >= Wv are
    # sliced off afterwards).  Round up to a lane-dense multiple of 128.
    L = Hv * Wp
    L_out = ((L + 127) // 128) * 128
    off_max = dilation * ((KH - 1) * Wp + (KW - 1))
    Lp = off_max + L_out                     # flat length incl. overrun tail

    # Flatten space, zero-pad the tail, cast to bf16 (f32 accumulation in kernel).
    x_flat = x_in.reshape(N, Cin, Hp * Wp)
    x_flat = jnp.pad(x_flat, ((0, 0), (0, 0), (0, Lp - Hp * Wp)))
    x_flat = x_flat.astype(jnp.bfloat16)

    # Per-tap weight matrices, tap order (kh, kw) matches the kernel loop.
    w_taps = jnp.transpose(w_used, (2, 3, 0, 1)).reshape(KH * KW, Cout, Cin)
    w_taps = w_taps.astype(jnp.bfloat16)
    b_mat = bias_eff.reshape(Cout, 1).astype(jnp.float32)

    taps = tuple((kh, kw) for kh in range(KH) for kw in range(KW))
    kernel = functools.partial(_concat_conv_kernel, taps=taps, wp=Wp,
                               dilation=dilation, l_out=L_out)

    # TODO(synk): for large feature maps, add a second grid axis over row bands
    # of Hv (overlapping input windows) so each block stays a few MiB and fits
    # v7x's smaller 64 MiB VMEM; at these shapes one image per step is ~KiB.
    out_flat = pl.pallas_call(
        kernel,
        out_shape=jax.ShapeDtypeStruct((N, Cout, L_out), x.dtype),
        grid_spec=pltpu.PrefetchScalarGridSpec(
            num_scalar_prefetch=0,
            grid=(N,),
            in_specs=[
                pl.BlockSpec((1, Cin, Lp), lambda n: (n, 0, 0)),
                pl.BlockSpec((KH * KW, Cout, Cin), lambda n: (0, 0, 0)),
                pl.BlockSpec((Cout, 1), lambda n: (0, 0)),
            ],
            out_specs=pl.BlockSpec((1, Cout, L_out), lambda n: (n, 0, 0)),
        ),
        compiler_params=pltpu.CompilerParams(
            dimension_semantics=("parallel",)),
    )(x_flat, w_taps, b_mat)

    # Already NCHW-flat: just drop the padded tail / garbage columns, subsample
    # for stride.  (No transpose needed.)
    dense = out_flat[:, :, :L].reshape(N, Cout, Hv, Wp)
    return dense[:, :, ::stride, 0:Wv:stride]


if __name__ == "__main__":
    key = jax.random.PRNGKey(0)
    k_x, k_w, k_b = jax.random.split(key, 3)

    # Shapes consistent with the module: ConcatConv2d(dim_in=4, dim_out=8)
    N, C, H, W = 2, 4, 16, 16
    dim_out, ksize = 8, 3
    Cin = C + 1

    x = jax.random.normal(k_x, (N, C, H, W), dtype=jnp.float32)
    t = jnp.float32(0.5)

    # Deterministic init mimicking torch Conv2d defaults (uniform +/- 1/sqrt(fan_in))
    fan_in = Cin * ksize * ksize
    bound = 1.0 / (fan_in ** 0.5)
    weight = jax.random.uniform(k_w, (dim_out, Cin, ksize, ksize),
                                dtype=jnp.float32, minval=-bound, maxval=bound)
    bias = jax.random.uniform(k_b, (dim_out,),
                              dtype=jnp.float32, minval=-bound, maxval=bound)

    # Reference input: concatenated (time, x), f32.
    tt = jnp.full((N, 1, H, W), t, dtype=x.dtype)
    xcat = jnp.concatenate([tt, x], axis=1)

    # --- default module config: padding=0 (time channel folded into bias) ---
    out = concat_conv2d(t, x, weight, bias)          # stride=1, padding=0
    out = jax.block_until_ready(out)
    ref = jax.lax.conv_general_dilated(
        xcat, weight, window_strides=(1, 1), padding="VALID",
        dimension_numbers=("NCHW", "OIHW", "NCHW")) + bias.reshape(1, -1, 1, 1)
    assert out.shape == (N, dim_out, H - ksize + 1, W - ksize + 1), out.shape
    # bf16 operands (f32 accumulation) => slightly looser tolerance than pure f32.
    assert jnp.allclose(out, ref, atol=2e-2, rtol=2e-2), "mismatch (padding=0)"

    # --- Neural-ODE usage: ConcatConv2d(dim, dim, 3, 1, 1) i.e. padding=1 ---
    out_p = concat_conv2d(t, x, weight, bias, stride=1, padding=1)
    out_p = jax.block_until_ready(out_p)
    ref_p = jax.lax.conv_general_dilated(
        xcat, weight, window_strides=(1, 1), padding=((1, 1), (1, 1)),
        dimension_numbers=("NCHW", "OIHW", "NCHW")) + bias.reshape(1, -1, 1, 1)
    assert out_p.shape == (N, dim_out, H, W), out_p.shape
    assert jnp.allclose(out_p, ref_p, atol=2e-2, rtol=2e-2), "mismatch (padding=1)"

    print("KERNEL_OK")
</pallas_src>

<mosaic_0001>
module attributes {stable_mosaic.version = 11 : i64} {
  func.func @_concat_conv_kernel(%arg0: i32, %arg1: memref<1x4x290xbf16, #tpu.memory_space<vmem>>, %arg2: memref<9x8x4xbf16, #tpu.memory_space<vmem>>, %arg3: memref<8x1xf32, #tpu.memory_space<vmem>>, %arg4: memref<1x8x256xf32, #tpu.memory_space<vmem>>) attributes {dimension_semantics = [#tpu.dimension_semantics<parallel>], iteration_bounds = array<i64: 2>, scalar_prefetch = 0 : i64, scratch_operands = 0 : i64, tpu.core_type = #tpu.core_type<tc>, window_params = [{transform_indices = @transform_0, window_bounds = array<i64: 1, 4, 290>}, {pipeline_mode = #tpu.pipeline_mode<synchronous>, transform_indices = @transform_1, window_bounds = array<i64: 9, 8, 4>}, {pipeline_mode = #tpu.pipeline_mode<synchronous>, transform_indices = @transform_2, window_bounds = array<i64: 8, 1>}, {transform_indices = @transform_3, window_bounds = array<i64: 1, 8, 256>}]} {
    %c0 = arith.constant 0 : index
    %c0_0 = arith.constant 0 : index
    %c0_1 = arith.constant 0 : index
    %0 = vector.load %arg1[%c0, %c0_0, %c0_1] : memref<1x4x290xbf16, #tpu.memory_space<vmem>>, vector<1x4x256xbf16>
    %1 = vector.shape_cast %0 : vector<1x4x256xbf16> to vector<4x256xbf16>
    %c0_2 = arith.constant 0 : index
    %c0_3 = arith.constant 0 : index
    %c0_4 = arith.constant 0 : index
    %2 = vector.load %arg2[%c0_2, %c0_3, %c0_4] : memref<9x8x4xbf16, #tpu.memory_space<vmem>>, vector<1x8x4xbf16>
    %3 = vector.shape_cast %2 : vector<1x8x4xbf16> to vector<8x4xbf16>
    %cst = arith.constant dense<0.000000e+00> : vector<8x256xf32>
    %4 = tpu.matmul %3, %1, %cst {dimension_numbers = #tpu.dot_dimension_numbers<[1], [0], [0], [1], [0, 0, 1, 1], [], []>} : vector<8x4xbf16>, vector<4x256xbf16>, vector<8x256xf32> -> vector<8x256xf32>
    %c0_5 = arith.constant 0 : index
    %c0_6 = arith.constant 0 : index
    %c1 = arith.constant 1 : index
    %5 = vector.load %arg1[%c0_5, %c0_6, %c1] : memref<1x4x290xbf16, #tpu.memory_space<vmem>>, vector<1x4x256xbf16>
    %6 = vector.shape_cast %5 : vector<1x4x256xbf16> to vector<4x256xbf16>
    %c1_7 = arith.constant 1 : index
    %c0_8 = arith.constant 0 : index
    %c0_9 = arith.constant 0 : index
    %7 = vector.load %arg2[%c1_7, %c0_8, %c0_9] : memref<9x8x4xbf16, #tpu.memory_space<vmem>>, vector<1x8x4xbf16>
    %8 = vector.shape_cast %7 : vector<1x8x4xbf16> to vector<8x4xbf16>
    %cst_10 = arith.constant dense<0.000000e+00> : vector<8x256xf32>
    %9 = tpu.matmul %8, %6, %cst_10 {dimension_numbers = #tpu.dot_dimension_numbers<[1], [0], [0], [1], [0, 0, 1, 1], [], []>} : vector<8x4xbf16>, vector<4x256xbf16>, vector<8x256xf32> -> vector<8x256xf32>
    %10 = arith.addf %4, %9 : vector<8x256xf32>
    %c0_11 = arith.constant 0 : index
    %c0_12 = arith.constant 0 : index
    %c2 = arith.constant 2 : index
    %11 = vector.load %arg1[%c0_11, %c0_12, %c2] : memref<1x4x290xbf16, #tpu.memory_space<vmem>>, vector<1x4x256xbf16>
    %12 = vector.shape_cast %11 : vector<1x4x256xbf16> to vector<4x256xbf16>
    %c2_13 = arith.constant 2 : index
    %c0_14 = arith.constant 0 : index
    %c0_15 = arith.constant 0 : index
    %13 = vector.load %arg2[%c2_13, %c0_14, %c0_15] : memref<9x8x4xbf16, #tpu.memory_space<vmem>>, vector<1x8x4xbf16>
    %14 = vector.shape_cast %13 : vector<1x8x4xbf16> to vector<8x4xbf16>
    %cst_16 = arith.constant dense<0.000000e+00> : vector<8x256xf32>
    %15 = tpu.matmul %14, %12, %cst_16 {dimension_numbers = #tpu.dot_dimension_numbers<[1], [0], [0], [1], [0, 0, 1, 1], [], []>} : vector<8x4xbf16>, vector<4x256xbf16>, vector<8x256xf32> -> vector<8x256xf32>
    %16 = arith.addf %10, %15 : vector<8x256xf32>
    %c0_17 = arith.constant 0 : index
    %c0_18 = arith.constant 0 : index
    %c16 = arith.constant 16 : index
    %17 = vector.load %arg1[%c0_17, %c0_18, %c16] : memref<1x4x290xbf16, #tpu.memory_space<vmem>>, vector<1x4x256xbf16>
    %18 = vector.shape_cast %17 : vector<1x4x256xbf16> to vector<4x256xbf16>
    %c3 = arith.constant 3 : index
    %c0_19 = arith.constant 0 : index
    %c0_20 = arith.constant 0 : index
    %19 = vector.load %arg2[%c3, %c0_19, %c0_20] : memref<9x8x4xbf16, #tpu.memory_space<vmem>>, vector<1x8x4xbf16>
    %20 = vector.shape_cast %19 : vector<1x8x4xbf16> to vector<8x4xbf16>
    %cst_21 = arith.constant dense<0.000000e+00> : vector<8x256xf32>
    %21 = tpu.matmul %20, %18, %cst_21 {dimension_numbers = #tpu.dot_dimension_numbers<[1], [0], [0], [1], [0, 0, 1, 1], [], []>} : vector<8x4xbf16>, vector<4x256xbf16>, vector<8x256xf32> -> vector<8x256xf32>
    %22 = arith.addf %16, %21 : vector<8x256xf32>
    %c0_22 = arith.constant 0 : index
    %c0_23 = arith.constant 0 : index
    %c17 = arith.constant 17 : index
    %23 = vector.load %arg1[%c0_22, %c0_23, %c17] : memref<1x4x290xbf16, #tpu.memory_space<vmem>>, vector<1x4x256xbf16>
    %24 = vector.shape_cast %23 : vector<1x4x256xbf16> to vector<4x256xbf16>
    %c4 = arith.constant 4 : index
    %c0_24 = arith.constant 0 : index
    %c0_25 = arith.constant 0 : index
    %25 = vector.load %arg2[%c4, %c0_24, %c0_25] : memref<9x8x4xbf16, #tpu.memory_space<vmem>>, vector<1x8x4xbf16>
    %26 = vector.shape_cast %25 : vector<1x8x4xbf16> to vector<8x4xbf16>
    %cst_26 = arith.constant dense<0.000000e+00> : vector<8x256xf32>
    %27 = tpu.matmul %26, %24, %cst_26 {dimension_numbers = #tpu.dot_dimension_numbers<[1], [0], [0], [1], [0, 0, 1, 1], [], []>} : vector<8x4xbf16>, vector<4x256xbf16>, vector<8x256xf32> -> vector<8x256xf32>
    %28 = arith.addf %22, %27 : vector<8x256xf32>
    %c0_27 = arith.constant 0 : index
    %c0_28 = arith.constant 0 : index
    %c18 = arith.constant 18 : index
    %29 = vector.load %arg1[%c0_27, %c0_28, %c18] : memref<1x4x290xbf16, #tpu.memory_space<vmem>>, vector<1x4x256xbf16>
    %30 = vector.shape_cast %29 : vector<1x4x256xbf16> to vector<4x256xbf16>
    %c5 = arith.constant 5 : index
    %c0_29 = arith.constant 0 : index
    %c0_30 = arith.constant 0 : index
    %31 = vector.load %arg2[%c5, %c0_29, %c0_30] : memref<9x8x4xbf16, #tpu.memory_space<vmem>>, vector<1x8x4xbf16>
    %32 = vector.shape_cast %31 : vector<1x8x4xbf16> to vector<8x4xbf16>
    %cst_31 = arith.constant dense<0.000000e+00> : vector<8x256xf32>
    %33 = tpu.matmul %32, %30, %cst_31 {dimension_numbers = #tpu.dot_dimension_numbers<[1], [0], [0], [1], [0, 0, 1, 1], [], []>} : vector<8x4xbf16>, vector<4x256xbf16>, vector<8x256xf32> -> vector<8x256xf32>
    %34 = arith.addf %28, %33 : vector<8x256xf32>
    %c0_32 = arith.constant 0 : index
    %c0_33 = arith.constant 0 : index
    %c32 = arith.constant 32 : index
    %35 = vector.load %arg1[%c0_32, %c0_33, %c32] : memref<1x4x290xbf16, #tpu.memory_space<vmem>>, vector<1x4x256xbf16>
    %36 = vector.shape_cast %35 : vector<1x4x256xbf16> to vector<4x256xbf16>
    %c6 = arith.constant 6 : index
    %c0_34 = arith.constant 0 : index
    %c0_35 = arith.constant 0 : index
    %37 = vector.load %arg2[%c6, %c0_34, %c0_35] : memref<9x8x4xbf16, #tpu.memory_space<vmem>>, vector<1x8x4xbf16>
    %38 = vector.shape_cast %37 : vector<1x8x4xbf16> to vector<8x4xbf16>
    %cst_36 = arith.constant dense<0.000000e+00> : vector<8x256xf32>
    %39 = tpu.matmul %38, %36, %cst_36 {dimension_numbers = #tpu.dot_dimension_numbers<[1], [0], [0], [1], [0, 0, 1, 1], [], []>} : vector<8x4xbf16>, vector<4x256xbf16>, vector<8x256xf32> -> vector<8x256xf32>
    %40 = arith.addf %34, %39 : vector<8x256xf32>
    %c0_37 = arith.constant 0 : index
    %c0_38 = arith.constant 0 : index
    %c33 = arith.constant 33 : index
    %41 = vector.load %arg1[%c0_37, %c0_38, %c33] : memref<1x4x290xbf16, #tpu.memory_space<vmem>>, vector<1x4x256xbf16>
    %42 = vector.shape_cast %41 : vector<1x4x256xbf16> to vector<4x256xbf16>
    %c7 = arith.constant 7 : index
    %c0_39 = arith.constant 0 : index
    %c0_40 = arith.constant 0 : index
    %43 = vector.load %arg2[%c7, %c0_39, %c0_40] : memref<9x8x4xbf16, #tpu.memory_space<vmem>>, vector<1x8x4xbf16>
    %44 = vector.shape_cast %43 : vector<1x8x4xbf16> to vector<8x4xbf16>
    %cst_41 = arith.constant dense<0.000000e+00> : vector<8x256xf32>
    %45 = tpu.matmul %44, %42, %cst_41 {dimension_numbers = #tpu.dot_dimension_numbers<[1], [0], [0], [1], [0, 0, 1, 1], [], []>} : vector<8x4xbf16>, vector<4x256xbf16>, vector<8x256xf32> -> vector<8x256xf32>
    %46 = arith.addf %40, %45 : vector<8x256xf32>
    %c0_42 = arith.constant 0 : index
    %c0_43 = arith.constant 0 : index
    %c34 = arith.constant 34 : index
    %47 = vector.load %arg1[%c0_42, %c0_43, %c34] : memref<1x4x290xbf16, #tpu.memory_space<vmem>>, vector<1x4x256xbf16>
    %48 = vector.shape_cast %47 : vector<1x4x256xbf16> to vector<4x256xbf16>
    %c8 = arith.constant 8 : index
    %c0_44 = arith.constant 0 : index
    %c0_45 = arith.constant 0 : index
    %49 = vector.load %arg2[%c8, %c0_44, %c0_45] : memref<9x8x4xbf16, #tpu.memory_space<vmem>>, vector<1x8x4xbf16>
    %50 = vector.shape_cast %49 : vector<1x8x4xbf16> to vector<8x4xbf16>
    %cst_46 = arith.constant dense<0.000000e+00> : vector<8x256xf32>
    %51 = tpu.matmul %50, %48, %cst_46 {dimension_numbers = #tpu.dot_dimension_numbers<[1], [0], [0], [1], [0, 0, 1, 1], [], []>} : vector<8x4xbf16>, vector<4x256xbf16>, vector<8x256xf32> -> vector<8x256xf32>
    %52 = arith.addf %46, %51 : vector<8x256xf32>
    %c0_47 = arith.constant 0 : index
    %c0_48 = arith.constant 0 : index
    %53 = vector.load %arg3[%c0_47, %c0_48] : memref<8x1xf32, #tpu.memory_space<vmem>>, vector<8x1xf32>
    %54 = vector.broadcast %53 : vector<8x1xf32> to vector<8x256xf32>
    %55 = arith.addf %52, %54 : vector<8x256xf32>
    %56 = vector.shape_cast %55 : vector<8x256xf32> to vector<1x8x256xf32>
    %c0_49 = arith.constant 0 : index
    %c0_50 = arith.constant 0 : index
    %c0_51 = arith.constant 0 : index
    %57 = vector.load %arg4[%c0_49, %c0_50, %c0_51] : memref<1x8x256xf32, #tpu.memory_space<vmem>>, vector<1x8x256xf32>
    tpu.vector_store %arg4[%c0_49, %c0_50, %c0_51], %56 {strides = array<i32>} : memref<1x8x256xf32, #tpu.memory_space<vmem>>, vector<1x8x256xf32>,
    return
  }
  func.func @transform_0(%arg0: i32) -> (i32, i32, i32) {
    %c0_i32 = arith.constant 0 : i32
    %c0_i32_0 = arith.constant 0 : i32
    %c0_i32_1 = arith.constant 0 : i32
    return %arg0, %c0_i32, %c0_i32_0 : i32, i32, i32
  }
  func.func @transform_1(%arg0: i32) -> (i32, i32, i32) {
    %c0_i32 = arith.constant 0 : i32
    %c0_i32_0 = arith.constant 0 : i32
    %c0_i32_1 = arith.constant 0 : i32
    %c0_i32_2 = arith.constant 0 : i32
    return %c0_i32, %c0_i32_0, %c0_i32_1 : i32, i32, i32
  }
  func.func @transform_2(%arg0: i32) -> (i32, i32) {
    %c0_i32 = arith.constant 0 : i32
    %c0_i32_0 = arith.constant 0 : i32
    %c0_i32_1 = arith.constant 0 : i32
    return %c0_i32, %c0_i32_0 : i32, i32
  }
  func.func @transform_3(%arg0: i32) -> (i32, i32, i32) {
    %c0_i32 = arith.constant 0 : i32
    %c0_i32_0 = arith.constant 0 : i32
    %c0_i32_1 = arith.constant 0 : i32
    return %arg0, %c0_i32, %c0_i32_0 : i32, i32, i32
  }
}

</mosaic_0001>

<llo_original>
// kernel: tpu_custom_call.1
$region0: #{tpu_custom_call.1}
  #allocation0 [shape = 'u32[]', space=smem, size = 0x4, offset = 0x4, fixed_abs, tag = 'smem constant byte address 0x4 - core index']
  #allocation1 [shape = 'u32[144,128]{1,0:T(1,128)}', space=vmem, size = 0x12000, scoped, tag = 'internal scratch']
  %s0 = inlined_call_operand.vmem [shape: bf16[2,4,290], index: 0, kind: input, shape index: {}]
  %s1 = inlined_call_operand.vmem [shape: bf16[9,8,4], index: 1, kind: input, shape index: {}]
  %s2 = inlined_call_operand.vmem [shape: f32[8,1], index: 2, kind: input, shape index: {}]
  %s3 = inlined_call_operand.hbm [shape: f32[2,8,256], index: 3, kind: output, shape index: {}]
  %s4 = sld [smem:[#allocation0]]
  $region45: #{tpu_custom_call.1} parent=0
    _
  %s6 = ssub.s32 1, %s4
  %s7 = scalar_select 0, %s6, %s4
  $region1: #{tpu_custom_call.1} parent=0
    #allocation2 [shape = 'u8[16384]{0}', space=vmem, size = 0x4000, scoped, tag = 'output window, operand 0']
    #allocation3 [shape = 's32[2]{0}', space=sflag, size = 0x8, scoped, tag = 'scoped memory for tpu_custom_call.1']
    %8 = vsyncpa [#allocation3], 0
    %s9 = scalar_lea.sflag [#allocation3], 1
    %10 = vsyncpa %s9, 0
    loop: start=0, step=1, limit=4
    $region2: #{tpu_custom_call.1} parent=1 // loop_pre_header
      _
    $region3: #{tpu_custom_call.1} parent=1 // loop_header
      %s12 = sphi 0, %s16
      %p13 = scmp.ge.s32.totalorder %s12, 4
      %s22 = sphi 0, %s24
      %s25 = sphi 0, %s22
      %s26 = sphi 0, %s25
      %s42 = sphi 0, %s26
      %s46 = sphi 0, %s46
      %s48 = sphi 0, %s46
      %s49 = sphi 0, %s48
      %s63 = sphi 0, %s49
      %s67 = sphi 0, %s67
      %s69 = sphi 0, %s67
      %s70 = sphi 0, %s69
      %s84 = sphi 0, %s70
      %s90 = sphi 0, %s92
      %s93 = sphi 0, %s90
      %s94 = sphi 0, %s93
      %s110 = sphi 0, %s94
    $region4: #{tpu_custom_call.1} parent=1 // loop_header_branch
      %15 = sbr.rel (%p13) target = $region8
    $region5: #{tpu_custom_call.1} parent=1 // loop_body
      %s17 = ssub.s32 %s12, 1
      %s18 = ssub.s32 %s12, 2
      %s19 = sadd.s32 %s12, 1
      %s20 = ssub.s32 %s12, %s19
      %p21 = scmp.eq.s32.totalorder %s20, 0
      %s23 = sadd.s32 %s22, 1
      %s24 = scalar_select %p21, %s22, %s23
      %p27 = pneg %p21
      %p28 = scmp.eq.s32.totalorder %s12, 1
      %p29 = por %p27, %p28
      %p30 = scmp.ne.s32.totalorder %s22, %s25
      %p31 = scmp.eq.s32.totalorder %s12, 0
      %p32 = por %p30, %p31
      %p33 = scmp.ne.s32.totalorder %s22, %s25
      %p34 = scmp.eq.s32.totalorder %s17, 1
      %p35 = por %p33, %p34
      %p36 = scmp.ne.s32.totalorder %s25, %s26
      %p37 = scmp.eq.s32.totalorder %s17, 0
      %p38 = por %p36, %p37
      %p39 = scmp.ne.s32.totalorder %s25, %s26
      %p40 = scmp.eq.s32.totalorder %s18, 1
      %p41 = por %p39, %p40
      %p43 = scmp.ne.s32.totalorder %s26, %s42
      %p44 = scmp.eq.s32.totalorder %s18, 0
      %p45 = por %p43, %p44
      %s47 = sadd.s32 %s46, 1
      %p50 = scmp.eq.s32.totalorder %s12, 1
      %p51 = scmp.ne.s32.totalorder %s46, %s48
      %p52 = scmp.eq.s32.totalorder %s12, 0
      %p53 = por %p51, %p52
      %p54 = scmp.ne.s32.totalorder %s46, %s48
      %p55 = scmp.eq.s32.totalorder %s17, 1
      %p56 = por %p54, %p55
      %p57 = scmp.ne.s32.totalorder %s48, %s49
      %p58 = scmp.eq.s32.totalorder %s17, 0
      %p59 = por %p57, %p58
      %p60 = scmp.ne.s32.totalorder %s48, %s49
      %p61 = scmp.eq.s32.totalorder %s18, 1
      %p62 = por %p60, %p61
      %p64 = scmp.ne.s32.totalorder %s49, %s63
      %p65 = scmp.eq.s32.totalorder %s18, 0
      %p66 = por %p64, %p65
      %s68 = sadd.s32 %s67, 1
      %p71 = scmp.eq.s32.totalorder %s12, 1
      %p72 = scmp.ne.s32.totalorder %s67, %s69
      %p73 = scmp.eq.s32.totalorder %s12, 0
      %p74 = por %p72, %p73
      %p75 = scmp.ne.s32.totalorder %s67, %s69
      %p76 = scmp.eq.s32.totalorder %s17, 1
      %p77 = por %p75, %p76
      %p78 = scmp.ne.s32.totalorder %s69, %s70
      %p79 = scmp.eq.s32.totalorder %s17, 0
      %p80 = por %p78, %p79
      %p81 = scmp.ne.s32.totalorder %s69, %s70
      %p82 = scmp.eq.s32.totalorder %s18, 1
      %p83 = por %p81, %p82
      %p85 = scmp.ne.s32.totalorder %s70, %s84
      %p86 = scmp.eq.s32.totalorder %s18, 0
      %p87 = por %p85, %p86
      %s88 = ssub.s32 %s12, %s19
      %p89 = scmp.eq.s32.totalorder %s88, 0
      %s91 = sadd.s32 %s90, 1
      %s92 = scalar_select %p89, %s90, %s91
      %p95 = pneg %p89
      %p96 = scmp.eq.s32.totalorder %s12, 1
      %p97 = por %p95, %p96
      %p98 = scmp.ne.s32.totalorder %s90, %s93
      %p99 = scmp.eq.s32.totalorder %s12, 0
      %p100 = por %p98, %p99
      %p101 = scmp.ne.s32.totalorder %s90, %s93
      %p102 = scmp.eq.s32.totalorder %s17, 1
      %p103 = por %p101, %p102
      %p104 = scmp.ne.s32.totalorder %s93, %s94
      %p105 = scmp.eq.s32.totalorder %s17, 0
      %p106 = por %p104, %p105
      %p107 = scmp.ne.s32.totalorder %s93, %s94
      %p108 = scmp.eq.s32.totalorder %s18, 1
      %p109 = por %p107, %p108
      %p111 = scmp.ne.s32.totalorder %s94, %s110
      %p112 = scmp.eq.s32.totalorder %s18, 0
      %p113 = por %p111, %p112
      %p114 = scmp.le.s32.totalorder 1, %s12
      %p115 = scmp.lt.s32.totalorder %s12, 3
      %p116 = pnand %p114, %p115
      %p117 = pneg %p116
      // Predicated region
      $region9: #{tpu_custom_call.1} parent=5 // pred_check
        _
      $region10: #{tpu_custom_call.1} parent=5 // pred_check_branch
        %119 = sbr.rel (%p116) target = $region12
      $region11: #{tpu_custom_call.1} parent=5 // pred_region
        %s120 = ssub.s32 %s12, 1
        // Predicated region
        $region13: #{tpu_custom_call.1} parent=11 // pred_check
          %p121 = pneg %p59
        $region14: #{tpu_custom_call.1} parent=11 // pred_check_branch
          %123 = sbr.rel (%p121) target = $region16
        $region15: #{tpu_custom_call.1} parent=11 // pred_region
          _
        $region16: #{tpu_custom_call.1} parent=11 // pred_fallthru
          _
        // Predicated region
        $region17: #{tpu_custom_call.1} parent=11 // pred_check
          %p124 = pneg %p80
        $region18: #{tpu_custom_call.1} parent=11 // pred_check_branch
          %126 = sbr.rel (%p124) target = $region20
        $region19: #{tpu_custom_call.1} parent=11 // pred_region
          _
        $region20: #{tpu_custom_call.1} parent=11 // pred_fallthru
          _
      $region12: #{tpu_custom_call.1} parent=5 // pred_fallthru
        _
      %p127 = scmp.lt.s32.totalorder %s12, 2
      // Predicated region
      $region21: #{tpu_custom_call.1} parent=5 // pred_check
        %p128 = pneg %p127
      $region22: #{tpu_custom_call.1} parent=5 // pred_check_branch
        %130 = sbr.rel (%p128) target = $region24
      $region23: #{tpu_custom_call.1} parent=5 // pred_region
        // Predicated region
        $region25: #{tpu_custom_call.1} parent=23 // pred_check
          %p131 = pneg %p32
        $region26: #{tpu_custom_call.1} parent=23 // pred_check_branch
          %133 = sbr.rel (%p131) target = $region28
        $region27: #{tpu_custom_call.1} parent=23 // pred_region
          %p134 = scmp.lt.s32.totalorder %s12, 1
          %s135 = scalar_select %p134, %s12, 1
          %s136 = smul.addr %s135, 3
          %s137 = smul.addr %s136, 2
          %s138 = scalar_lea.vmem %s0, %s137
        $region28: #{tpu_custom_call.1} parent=23 // pred_fallthru
          _
      $region24: #{tpu_custom_call.1} parent=5 // pred_fallthru
        _
      %p139 = scmp.le.s32.totalorder 1, %s12
      %p140 = scmp.lt.s32.totalorder %s12, 3
      %p141 = pnand %p139, %p140
      %p142 = pneg %p141
      // Predicated region
      $region29: #{tpu_custom_call.1} parent=5 // pred_check
        _
      $region30: #{tpu_custom_call.1} parent=5 // pred_check_branch
        %144 = sbr.rel (%p141) target = $region32
      $region31: #{tpu_custom_call.1} parent=5 // pred_region
        %s145 = ssub.s32 %s12, 1
        %p146 = scmp.lt.s32.totalorder %s17, 1
        %s147 = scalar_select %p146, %s17, 1
        %s148 = smul.addr %s147, 3
        %s149 = smul.addr %s148, 2
        %s150 = scalar_lea.vmem %s0, %s149
        %p151 = pneg %p38
        %p152 = pneg %p35
        %p153 = pneg %p59
        %p154 = pneg %p56
        %p155 = pneg %p80
        %p156 = pneg %p77
        %p157 = pneg %p106
        %p158 = pneg %p103
        %s159 = sand.u32 %s93, 1
        %s160 = scalar_lea.sflag [#allocation3], %s159
        %s161 = sand.u32 %s93, 1
        %s162 = smul.addr %s161, 16
        %s163 = scalar_lea.vmem [#allocation2], %s162
        %p164 = scmp.lt.s32.totalorder %s17, 1
        %s165 = scalar_select %p164, %s17, 1
        %s166 = smul.addr %s165, 3
        %s167 = smul.addr %s166, 2
        %s168 = scalar_lea.vmem %s0, %s167
        %v170 = vld [vmem:[%s168] sm:$0xf]
        %v171 = vld [vmem:[%s1] sm:$0xf]
        %v172 = vld [vmem:[%s168] sm:$0x3f]
        %s173 = scalar_lea.vmem %s1, 4
        %v174 = vld [vmem:[%s173] sm:$0xf]
        %v176 = vcombine.high %v172, %v172
        %v178 = vunpack.c.l.s4 1983009808
        %v179 = vunpack.c.0.s8 %v178
        %v180 = vlaneseq
        %v181 = vshrl.u32 %v180, 7
        %v182 = vsub.s32 %v179, %v181
        %v183 = vrot.slane %v172, %v182
        %v185 = vunpack.c.l.s4 1983009808
        %v186 = vunpack.c.0.s8 %v185
        %v187 = vlaneseq
        %v188 = vshrl.u32 %v187, 7
        %v189 = vsub.s32 %v186, %v188
        %v190 = vrot.slane %v176, %v189
        %v191 = vcombine.high %v183, %v183
        %192 = vrot.lane.b32.xlu0 %v183, 127
        %v193 = vpop.permute.xlu0 %192
        %194 = vrot.lane.b32.xlu0 %v191, 127
        %v195 = vpop.permute.xlu0 %194
        %196 = vrot.lane.b32.xlu0 %v190, 127
        %v197 = vpop.permute.xlu0 %196
        %vm198 = vcmask 1039360
        %v199 = vsel %vm198, %v193, %v195
        %v200 = vsel %vm198, %v195, %v197
        %vm201 = vcmask 31744
        %v203 = vsel %vm201, %v174, 0
        %vm205 = vcmask 1041408
        %v207 = vsel %vm205, %v199, 0
        %v210 = vsel %vm205, %v200, 0
        %212 = vmatprep.subr.bf16.mxu0 %v210
        %213 = vmatpush1.bf16.msra.mxu0 %v207
        %214 = vmatprep.subr.bf16.mxu0 0
        %215 = vmatpush1.bf16.msra.mxu0 0
        %216 = vmatprep.subr.bf16.mxu0 0
        %217 = vmatpush1.bf16.msra.mxu0 0
        %218 = vmatprep.subr.bf16.mxu0 0
        %219 = vmatpush1.bf16.msra.mxu0 0
        %220 = vmatprep.subr.bf16.mxu0 0
        %221 = vmatpush1.bf16.msra.mxu0 0
        %222 = vmatprep.subr.bf16.mxu0 0
        %223 = vmatpush1.bf16.msra.mxu0 0
        %224 = vmatprep.subr.bf16.mxu0 0
        %225 = vmatpush1.bf16.msra.mxu0 0
        %226 = vmatprep.subr.bf16.mxu0 0
        %227 = vmatpush1.bf16.msra.mxu0 0
        %228 = vmatprep.subr.bf16.mxu0 0
        %229 = vmatpush1.bf16.msra.mxu0 0
        %230 = vmatprep.subr.bf16.mxu0 0
        %231 = vmatpush1.bf16.msra.mxu0 0
        %232 = vmatprep.subr.bf16.mxu0 0
        %233 = vmatpush1.bf16.msra.mxu0 0
        %234 = vmatprep.subr.bf16.mxu0 0
        %235 = vmatpush1.bf16.msra.mxu0 0
        %236 = vmatprep.subr.bf16.mxu0 0
        %237 = vmatpush1.bf16.msra.mxu0 0
        %238 = vmatprep.subr.bf16.mxu0 0
        %239 = vmatpush1.bf16.msra.mxu0 0
        %240 = vmatprep.subr.bf16.mxu0 0
        %241 = vmatpush1.bf16.msra.mxu0 0
        %242 = vmatprep.subr.bf16.mxu0 0
        %243 = vmatpush1.bf16.msra.mxu0 0
        %244 = vmatprep.mubr.bf16.mxu0 0
        %245 = vmatmul.mubr.bf16.gmra.mrb[0].mxu0 %v203
        %v246 = vpop.f32.mrb[0].mxu0
        %v247 = vadd.f32 0.0, %v246
        %v248 = vpop.f32.mrb[0].mxu0
        %v249 = vadd.f32 0.0, %v248
        %v250 = vpop.f32.mrb[0].mxu0
        %v251 = vpop.f32.mrb[0].mxu0
        %252 = vdwg.mxu0
        %v255 = vunpack.c.l.s4 1983009808
        %v256 = vunpack.c.0.s8 %v255
        %v257 = vlaneseq
        %v258 = vshrl.u32 %v257, 7
        %v259 = vsub.s32 %v256, %v258
        %v260 = vrot.slane %v170, %v259
        %v261 = vcombine.high %v260, %v260
        %v263 = vsel %vm201, %v171, 0
        %v266 = vsel %vm205, %v260, 0
        %v269 = vsel %vm205, %v261, 0
        %271 = vmatprep.subr.bf16.mxu0 %v269
        %272 = vmatpush1.bf16.msra.mxu0 %v266
        %273 = vmatprep.subr.bf16.mxu0 0
        %274 = vmatpush1.bf16.msra.mxu0 0
        %275 = vmatprep.subr.bf16.mxu0 0
        %276 = vmatpush1.bf16.msra.mxu0 0
        %277 = vmatprep.subr.bf16.mxu0 0
        %278 = vmatpush1.bf16.msra.mxu0 0
        %279 = vmatprep.subr.bf16.mxu0 0
        %280 = vmatpush1.bf16.msra.mxu0 0
        %281 = vmatprep.subr.bf16.mxu0 0
        %282 = vmatpush1.bf16.msra.mxu0 0
        %283 = vmatprep.subr.bf16.mxu0 0
        %284 = vmatpush1.bf16.msra.mxu0 0
        %285 = vmatprep.subr.bf16.mxu0 0
        %286 = vmatpush1.bf16.msra.mxu0 0
        %287 = vmatprep.subr.bf16.mxu0 0
        %288 = vmatpush1.bf16.msra.mxu0 0
        %289 = vmatprep.subr.bf16.mxu0 0
        %290 = vmatpush1.bf16.msra.mxu0 0
        %291 = vmatprep.subr.bf16.mxu0 0
        %292 = vmatpush1.bf16.msra.mxu0 0
        %293 = vmatprep.subr.bf16.mxu0 0
        %294 = vmatpush1.bf16.msra.mxu0 0
        %295 = vmatprep.subr.bf16.mxu0 0
        %296 = vmatpush1.bf16.msra.mxu0 0
        %297 = vmatprep.subr.bf16.mxu0 0
        %298 = vmatpush1.bf16.msra.mxu0 0
        %299 = vmatprep.subr.bf16.mxu0 0
        %300 = vmatpush1.bf16.msra.mxu0 0
        %301 = vmatprep.subr.bf16.mxu0 0
        %302 = vmatpush1.bf16.msra.mxu0 0
        %303 = vmatprep.mubr.bf16.mxu0 0
        %304 = vmatmul.mubr.bf16.gmra.mrb[0].mxu0 %v263
        %v305 = vpop.f32.mrb[0].mxu0
        %v306 = vadd.f32 %v247, %v305
        %v307 = vpop.f32.mrb[0].mxu0
        %v308 = vadd.f32 %v249, %v307
        %v309 = vpop.f32.mrb[0].mxu0
        %v310 = vpop.f32.mrb[0].mxu0
        %311 = vdwg.mxu0
        %v312 = vld [vmem:[%s168] sm:$0x3f]
        %s313 = scalar_lea.vmem %s1, 8
        %v314 = vld [vmem:[%s313] sm:$0xf]
        %v316 = vcombine.high %v312, %v312
        %v318 = vunpack.c.l.s4 1983009808
        %v319 = vunpack.c.0.s8 %v318
        %v320 = vlaneseq
        %v321 = vshrl.u32 %v320, 7
        %v322 = vsub.s32 %v319, %v321
        %v323 = vrot.slane %v312, %v322
        %v325 = vunpack.c.l.s4 1983009808
        %v326 = vunpack.c.0.s8 %v325
        %v327 = vlaneseq
        %v328 = vshrl.u32 %v327, 7
        %v329 = vsub.s32 %v326, %v328
        %v330 = vrot.slane %v316, %v329
        %v331 = vcombine.high %v323, %v323
        %332 = vrot.lane.b32.xlu0 %v323, 126
        %v333 = vpop.permute.xlu0 %332
        %334 = vrot.lane.b32.xlu0 %v331, 126
        %v335 = vpop.permute.xlu0 %334
        %336 = vrot.lane.b32.xlu0 %v330, 126
        %v337 = vpop.permute.xlu0 %336
        %vm338 = vcmask 1031168
        %v339 = vsel %vm338, %v333, %v335
        %v340 = vsel %vm338, %v335, %v337
        %v342 = vsel %vm201, %v314, 0
        %v345 = vsel %vm205, %v339, 0
        %v348 = vsel %vm205, %v340, 0
        %350 = vmatprep.subr.bf16.mxu0 %v348
        %351 = vmatpush1.bf16.msra.mxu0 %v345
        %352 = vmatprep.subr.bf16.mxu0 0
        %353 = vmatpush1.bf16.msra.mxu0 0
        %354 = vmatprep.subr.bf16.mxu0 0
        %355 = vmatpush1.bf16.msra.mxu0 0
        %356 = vmatprep.subr.bf16.mxu0 0
        %357 = vmatpush1.bf16.msra.mxu0 0
        %358 = vmatprep.subr.bf16.mxu0 0
        %359 = vmatpush1.bf16.msra.mxu0 0
        %360 = vmatprep.subr.bf16.mxu0 0
        %361 = vmatpush1.bf16.msra.mxu0 0
        %362 = vmatprep.subr.bf16.mxu0 0
        %363 = vmatpush1.bf16.msra.mxu0 0
        %364 = vmatprep.subr.bf16.mxu0 0
        %365 = vmatpush1.bf16.msra.mxu0 0
        %366 = vmatprep.subr.bf16.mxu0 0
        %367 = vmatpush1.bf16.msra.mxu0 0
        %368 = vmatprep.subr.bf16.mxu0 0
        %369 = vmatpush1.bf16.msra.mxu0 0
        %370 = vmatprep.subr.bf16.mxu0 0
        %371 = vmatpush1.bf16.msra.mxu0 0
        %372 = vmatprep.subr.bf16.mxu0 0
        %373 = vmatpush1.bf16.msra.mxu0 0
        %374 = vmatprep.subr.bf16.mxu0 0
        %375 = vmatpush1.bf16.msra.mxu0 0
        %376 = vmatprep.subr.bf16.mxu0 0
        %377 = vmatpush1.bf16.msra.mxu0 0
        %378 = vmatprep.subr.bf16.mxu0 0
        %379 = vmatpush1.bf16.msra.mxu0 0
        %380 = vmatprep.subr.bf16.mxu0 0
        %381 = vmatpush1.bf16.msra.mxu0 0
        %382 = vmatprep.mubr.bf16.mxu0 0
        %383 = vmatmul.mubr.bf16.gmra.mrb[0].mxu0 %v342
        %v384 = vpop.f32.mrb[0].mxu0
        %v385 = vadd.f32 0.0, %v384
        %v386 = vpop.f32.mrb[0].mxu0
        %v387 = vadd.f32 0.0, %v386
        %v388 = vpop.f32.mrb[0].mxu0
        %v389 = vpop.f32.mrb[0].mxu0
        %390 = vdwg.mxu0
        %v391 = vadd.f32 %v306, %v385
        %v392 = vadd.f32 %v308, %v387
        %v393 = vld [vmem:[%s168] sm:$0x3f]
        %s394 = scalar_lea.vmem %s1, 12
        %v395 = vld [vmem:[%s394] sm:$0xf]
        %v397 = vcombine.high %v393, %v393
        %v399 = vunpack.c.l.s4 1983009808
        %v400 = vunpack.c.0.s8 %v399
        %v401 = vlaneseq
        %v402 = vshrl.u32 %v401, 7
        %v403 = vsub.s32 %v400, %v402
        %v404 = vrot.slane %v393, %v403
        %v406 = vunpack.c.l.s4 1983009808
        %v407 = vunpack.c.0.s8 %v406
        %v408 = vlaneseq
        %v409 = vshrl.u32 %v408, 7
        %v410 = vsub.s32 %v407, %v409
        %v411 = vrot.slane %v397, %v410
        %v412 = vcombine.high %v404, %v404
        %413 = vrot.lane.b32.xlu0 %v404, 112
        %v414 = vpop.permute.xlu0 %413
        %415 = vrot.lane.b32.xlu0 %v412, 112
        %v416 = vpop.permute.xlu0 %415
        %417 = vrot.lane.b32.xlu0 %v411, 112
        %v418 = vpop.permute.xlu0 %417
        %vm419 = vcmask 916480
        %v420 = vsel %vm419, %v414, %v416
        %v421 = vsel %vm419, %v416, %v418
        %v423 = vsel %vm201, %v395, 0
        %v426 = vsel %vm205, %v420, 0
        %v429 = vsel %vm205, %v421, 0
        %431 = vmatprep.subr.bf16.mxu0 %v429
        %432 = vmatpush1.bf16.msra.mxu0 %v426
        %433 = vmatprep.subr.bf16.mxu0 0
        %434 = vmatpush1.bf16.msra.mxu0 0
        %435 = vmatprep.subr.bf16.mxu0 0
        %436 = vmatpush1.bf16.msra.mxu0 0
        %437 = vmatprep.subr.bf16.mxu0 0
        %438 = vmatpush1.bf16.msra.mxu0 0
        %439 = vmatprep.subr.bf16.mxu0 0
        %440 = vmatpush1.bf16.msra.mxu0 0
        %441 = vmatprep.subr.bf16.mxu0 0
        %442 = vmatpush1.bf16.msra.mxu0 0
        %443 = vmatprep.subr.bf16.mxu0 0
        %444 = vmatpush1.bf16.msra.mxu0 0
        %445 = vmatprep.subr.bf16.mxu0 0
        %446 = vmatpush1.bf16.msra.mxu0 0
        %447 = vmatprep.subr.bf16.mxu0 0
        %448 = vmatpush1.bf16.msra.mxu0 0
        %449 = vmatprep.subr.bf16.mxu0 0
        %450 = vmatpush1.bf16.msra.mxu0 0
        %451 = vmatprep.subr.bf16.mxu0 0
        %452 = vmatpush1.bf16.msra.mxu0 0
        %453 = vmatprep.subr.bf16.mxu0 0
        %454 = vmatpush1.bf16.msra.mxu0 0
        %455 = vmatprep.subr.bf16.mxu0 0
        %456 = vmatpush1.bf16.msra.mxu0 0
        %457 = vmatprep.subr.bf16.mxu0 0
        %458 = vmatpush1.bf16.msra.mxu0 0
        %459 = vmatprep.subr.bf16.mxu0 0
        %460 = vmatpush1.bf16.msra.mxu0 0
        %461 = vmatprep.subr.bf16.mxu0 0
        %462 = vmatpush1.bf16.msra.mxu0 0
        %463 = vmatprep.mubr.bf16.mxu0 0
        %464 = vmatmul.mubr.bf16.gmra.mrb[0].mxu0 %v423
        %v465 = vpop.f32.mrb[0].mxu0
        %v466 = vadd.f32 0.0, %v465
        %v467 = vpop.f32.mrb[0].mxu0
        %v468 = vadd.f32 0.0, %v467
        %v469 = vpop.f32.mrb[0].mxu0
        %v470 = vpop.f32.mrb[0].mxu0
        %471 = vdwg.mxu0
        %v472 = vadd.f32 %v391, %v466
        %v473 = vadd.f32 %v392, %v468
        %v474 = vld [vmem:[%s168] sm:$0x3f]
        %s475 = scalar_lea.vmem %s1, 16
        %v476 = vld [vmem:[%s475] sm:$0xf]
        %v478 = vcombine.high %v474, %v474
        %v480 = vunpack.c.l.s4 1983009808
        %v481 = vunpack.c.0.s8 %v480
        %v482 = vlaneseq
        %v483 = vshrl.u32 %v482, 7
        %v484 = vsub.s32 %v481, %v483
        %v485 = vrot.slane %v474, %v484
        %v487 = vunpack.c.l.s4 1983009808
        %v488 = vunpack.c.0.s8 %v487
        %v489 = vlaneseq
        %v490 = vshrl.u32 %v489, 7
        %v491 = vsub.s32 %v488, %v490
        %v492 = vrot.slane %v478, %v491
        %v493 = vcombine.high %v485, %v485
        %494 = vrot.lane.b32.xlu0 %v485, 111
        %v495 = vpop.permute.xlu0 %494
        %496 = vrot.lane.b32.xlu0 %v493, 111
        %v497 = vpop.permute.xlu0 %496
        %498 = vrot.lane.b32.xlu0 %v492, 111
        %v499 = vpop.permute.xlu0 %498
        %vm500 = vcmask 908288
        %v501 = vsel %vm500, %v495, %v497
        %v502 = vsel %vm500, %v497, %v499
        %v504 = vsel %vm201, %v476, 0
        %v507 = vsel %vm205, %v501, 0
        %v510 = vsel %vm205, %v502, 0
        %512 = vmatprep.subr.bf16.mxu0 %v510
        %513 = vmatpush1.bf16.msra.mxu0 %v507
        %514 = vmatprep.subr.bf16.mxu0 0
        %515 = vmatpush1.bf16.msra.mxu0 0
        %516 = vmatprep.subr.bf16.mxu0 0
        %517 = vmatpush1.bf16.msra.mxu0 0
        %518 = vmatprep.subr.bf16.mxu0 0
        %519 = vmatpush1.bf16.msra.mxu0 0
        %520 = vmatprep.subr.bf16.mxu0 0
        %521 = vmatpush1.bf16.msra.mxu0 0
        %522 = vmatprep.subr.bf16.mxu0 0
        %523 = vmatpush1.bf16.msra.mxu0 0
        %524 = vmatprep.subr.bf16.mxu0 0
        %525 = vmatpush1.bf16.msra.mxu0 0
        %526 = vmatprep.subr.bf16.mxu0 0
        %527 = vmatpush1.bf16.msra.mxu0 0
        %528 = vmatprep.subr.bf16.mxu0 0
        %529 = vmatpush1.bf16.msra.mxu0 0
        %530 = vmatprep.subr.bf16.mxu0 0
        %531 = vmatpush1.bf16.msra.mxu0 0
        %532 = vmatprep.subr.bf16.mxu0 0
        %533 = vmatpush1.bf16.msra.mxu0 0
        %534 = vmatprep.subr.bf16.mxu0 0
        %535 = vmatpush1.bf16.msra.mxu0 0
        %536 = vmatprep.subr.bf16.mxu0 0
        %537 = vmatpush1.bf16.msra.mxu0 0
        %538 = vmatprep.subr.bf16.mxu0 0
        %539 = vmatpush1.bf16.msra.mxu0 0
        %540 = vmatprep.subr.bf16.mxu0 0
        %541 = vmatpush1.bf16.msra.mxu0 0
        %542 = vmatprep.subr.bf16.mxu0 0
        %543 = vmatpush1.bf16.msra.mxu0 0
        %544 = vmatprep.mubr.bf16.mxu0 0
        %545 = vmatmul.mubr.bf16.gmra.mrb[0].mxu0 %v504
        %v546 = vpop.f32.mrb[0].mxu0
        %v547 = vadd.f32 0.0, %v546
        %v548 = vpop.f32.mrb[0].mxu0
        %v549 = vadd.f32 0.0, %v548
        %v550 = vpop.f32.mrb[0].mxu0
        %v551 = vpop.f32.mrb[0].mxu0
        %552 = vdwg.mxu0
        %v553 = vadd.f32 %v472, %v547
        %v554 = vadd.f32 %v473, %v549
        %v555 = vld [vmem:[%s168] sm:$0x3f]
        %s556 = scalar_lea.vmem %s1, 20
        %v557 = vld [vmem:[%s556] sm:$0xf]
        %v559 = vcombine.high %v555, %v555
        %v561 = vunpack.c.l.s4 1983009808
        %v562 = vunpack.c.0.s8 %v561
        %v563 = vlaneseq
        %v564 = vshrl.u32 %v563, 7
        %v565 = vsub.s32 %v562, %v564
        %v566 = vrot.slane %v555, %v565
        %v568 = vunpack.c.l.s4 1983009808
        %v569 = vunpack.c.0.s8 %v568
        %v570 = vlaneseq
        %v571 = vshrl.u32 %v570, 7
        %v572 = vsub.s32 %v569, %v571
        %v573 = vrot.slane %v559, %v572
        %v574 = vcombine.high %v566, %v566
        %575 = vrot.lane.b32.xlu0 %v566, 110
        %v576 = vpop.permute.xlu0 %575
        %577 = vrot.lane.b32.xlu0 %v574, 110
        %v578 = vpop.permute.xlu0 %577
        %579 = vrot.lane.b32.xlu0 %v573, 110
        %v580 = vpop.permute.xlu0 %579
        %vm581 = vcmask 900096
        %v582 = vsel %vm581, %v576, %v578
        %v583 = vsel %vm581, %v578, %v580
        %v585 = vsel %vm201, %v557, 0
        %v588 = vsel %vm205, %v582, 0
        %v591 = vsel %vm205, %v583, 0
        %593 = vmatprep.subr.bf16.mxu0 %v591
        %594 = vmatpush1.bf16.msra.mxu0 %v588
        %595 = vmatprep.subr.bf16.mxu0 0
        %596 = vmatpush1.bf16.msra.mxu0 0
        %597 = vmatprep.subr.bf16.mxu0 0
        %598 = vmatpush1.bf16.msra.mxu0 0
        %599 = vmatprep.subr.bf16.mxu0 0
        %600 = vmatpush1.bf16.msra.mxu0 0
        %601 = vmatprep.subr.bf16.mxu0 0
        %602 = vmatpush1.bf16.msra.mxu0 0
        %603 = vmatprep.subr.bf16.mxu0 0
        %604 = vmatpush1.bf16.msra.mxu0 0
        %605 = vmatprep.subr.bf16.mxu0 0
        %606 = vmatpush1.bf16.msra.mxu0 0
        %607 = vmatprep.subr.bf16.mxu0 0
        %608 = vmatpush1.bf16.msra.mxu0 0
        %609 = vmatprep.subr.bf16.mxu0 0
        %610 = vmatpush1.bf16.msra.mxu0 0
        %611 = vmatprep.subr.bf16.mxu0 0
        %612 = vmatpush1.bf16.msra.mxu0 0
        %613 = vmatprep.subr.bf16.mxu0 0
        %614 = vmatpush1.bf16.msra.mxu0 0
        %615 = vmatprep.subr.bf16.mxu0 0
        %616 = vmatpush1.bf16.msra.mxu0 0
        %617 = vmatprep.subr.bf16.mxu0 0
        %618 = vmatpush1.bf16.msra.mxu0 0
        %619 = vmatprep.subr.bf16.mxu0 0
        %620 = vmatpush1.bf16.msra.mxu0 0
        %621 = vmatprep.subr.bf16.mxu0 0
        %622 = vmatpush1.bf16.msra.mxu0 0
        %623 = vmatprep.subr.bf16.mxu0 0
        %624 = vmatpush1.bf16.msra.mxu0 0
        %625 = vmatprep.mubr.bf16.mxu0 0
        %626 = vmatmul.mubr.bf16.gmra.mrb[0].mxu0 %v585
        %v627 = vpop.f32.mrb[0].mxu0
        %v628 = vadd.f32 0.0, %v627
        %v629 = vpop.f32.mrb[0].mxu0
        %v630 = vadd.f32 0.0, %v629
        %v631 = vpop.f32.mrb[0].mxu0
        %v632 = vpop.f32.mrb[0].mxu0
        %633 = vdwg.mxu0
        %v634 = vadd.f32 %v553, %v628
        %v635 = vadd.f32 %v554, %v630
        %v636 = vld [vmem:[%s168] sm:$0x3f]
        %s637 = scalar_lea.vmem %s1, 24
        %v638 = vld [vmem:[%s637] sm:$0xf]
        %v640 = vcombine.high %v636, %v636
        %v642 = vunpack.c.l.s4 1983009808
        %v643 = vunpack.c.0.s8 %v642
        %v644 = vlaneseq
        %v645 = vshrl.u32 %v644, 7
        %v646 = vsub.s32 %v643, %v645
        %v647 = vrot.slane %v636, %v646
        %v649 = vunpack.c.l.s4 1983009808
        %v650 = vunpack.c.0.s8 %v649
        %v651 = vlaneseq
        %v652 = vshrl.u32 %v651, 7
        %v653 = vsub.s32 %v650, %v652
        %v654 = vrot.slane %v640, %v653
        %v655 = vcombine.high %v647, %v647
        %656 = vrot.lane.b32.xlu0 %v647, 96
        %v657 = vpop.permute.xlu0 %656
        %658 = vrot.lane.b32.xlu0 %v655, 96
        %v659 = vpop.permute.xlu0 %658
        %660 = vrot.lane.b32.xlu0 %v654, 96
        %v661 = vpop.permute.xlu0 %660
        %vm662 = vcmask 785408
        %v663 = vsel %vm662, %v657, %v659
        %v664 = vsel %vm662, %v659, %v661
        %v666 = vsel %vm201, %v638, 0
        %v669 = vsel %vm205, %v663, 0
        %v672 = vsel %vm205, %v664, 0
        %674 = vmatprep.subr.bf16.mxu0 %v672
        %675 = vmatpush1.bf16.msra.mxu0 %v669
        %676 = vmatprep.subr.bf16.mxu0 0
        %677 = vmatpush1.bf16.msra.mxu0 0
        %678 = vmatprep.subr.bf16.mxu0 0
        %679 = vmatpush1.bf16.msra.mxu0 0
        %680 = vmatprep.subr.bf16.mxu0 0
        %681 = vmatpush1.bf16.msra.mxu0 0
        %682 = vmatprep.subr.bf16.mxu0 0
        %683 = vmatpush1.bf16.msra.mxu0 0
        %684 = vmatprep.subr.bf16.mxu0 0
        %685 = vmatpush1.bf16.msra.mxu0 0
        %686 = vmatprep.subr.bf16.mxu0 0
        %687 = vmatpush1.bf16.msra.mxu0 0
        %688 = vmatprep.subr.bf16.mxu0 0
        %689 = vmatpush1.bf16.msra.mxu0 0
        %690 = vmatprep.subr.bf16.mxu0 0
        %691 = vmatpush1.bf16.msra.mxu0 0
        %692 = vmatprep.subr.bf16.mxu0 0
        %693 = vmatpush1.bf16.msra.mxu0 0
        %694 = vmatprep.subr.bf16.mxu0 0
        %695 = vmatpush1.bf16.msra.mxu0 0
        %696 = vmatprep.subr.bf16.mxu0 0
        %697 = vmatpush1.bf16.msra.mxu0 0
        %698 = vmatprep.subr.bf16.mxu0 0
        %699 = vmatpush1.bf16.msra.mxu0 0
        %700 = vmatprep.subr.bf16.mxu0 0
        %701 = vmatpush1.bf16.msra.mxu0 0
        %702 = vmatprep.subr.bf16.mxu0 0
        %703 = vmatpush1.bf16.msra.mxu0 0
        %704 = vmatprep.subr.bf16.mxu0 0
        %705 = vmatpush1.bf16.msra.mxu0 0
        %706 = vmatprep.mubr.bf16.mxu0 0
        %707 = vmatmul.mubr.bf16.gmra.mrb[0].mxu0 %v666
        %v708 = vpop.f32.mrb[0].mxu0
        %v709 = vadd.f32 0.0, %v708
        %v710 = vpop.f32.mrb[0].mxu0
        %v711 = vadd.f32 0.0, %v710
        %v712 = vpop.f32.mrb[0].mxu0
        %v713 = vpop.f32.mrb[0].mxu0
        %714 = vdwg.mxu0
        %v715 = vadd.f32 %v634, %v709
        %v716 = vadd.f32 %v635, %v711
        %v717 = vld [vmem:[%s168] sm:$0x3f]
        %s718 = scalar_lea.vmem %s1, 28
        %v719 = vld [vmem:[%s718] sm:$0xf]
        %v721 = vcombine.high %v717, %v717
        %v723 = vunpack.c.l.s4 1983009808
        %v724 = vunpack.c.0.s8 %v723
        %v725 = vlaneseq
        %v726 = vshrl.u32 %v725, 7
        %v727 = vsub.s32 %v724, %v726
        %v728 = vrot.slane %v717, %v727
        %v730 = vunpack.c.l.s4 1983009808
        %v731 = vunpack.c.0.s8 %v730
        %v732 = vlaneseq
        %v733 = vshrl.u32 %v732, 7
        %v734 = vsub.s32 %v731, %v733
        %v735 = vrot.slane %v721, %v734
        %v736 = vcombine.high %v728, %v728
        %737 = vrot.lane.b32.xlu0 %v728, 95
        %v738 = vpop.permute.xlu0 %737
        %739 = vrot.lane.b32.xlu0 %v736, 95
        %v740 = vpop.permute.xlu0 %739
        %741 = vrot.lane.b32.xlu0 %v735, 95
        %v742 = vpop.permute.xlu0 %741
        %vm743 = vcmask 777216
        %v744 = vsel %vm743, %v738, %v740
        %v745 = vsel %vm743, %v740, %v742
        %v747 = vsel %vm201, %v719, 0
        %v750 = vsel %vm205, %v744, 0
        %v753 = vsel %vm205, %v745, 0
        %755 = vmatprep.subr.bf16.mxu0 %v753
        %756 = vmatpush1.bf16.msra.mxu0 %v750
        %757 = vmatprep.subr.bf16.mxu0 0
        %758 = vmatpush1.bf16.msra.mxu0 0
        %759 = vmatprep.subr.bf16.mxu0 0
        %760 = vmatpush1.bf16.msra.mxu0 0
        %761 = vmatprep.subr.bf16.mxu0 0
        %762 = vmatpush1.bf16.msra.mxu0 0
        %763 = vmatprep.subr.bf16.mxu0 0
        %764 = vmatpush1.bf16.msra.mxu0 0
        %765 = vmatprep.subr.bf16.mxu0 0
        %766 = vmatpush1.bf16.msra.mxu0 0
        %767 = vmatprep.subr.bf16.mxu0 0
        %768 = vmatpush1.bf16.msra.mxu0 0
        %769 = vmatprep.subr.bf16.mxu0 0
        %770 = vmatpush1.bf16.msra.mxu0 0
        %771 = vmatprep.subr.bf16.mxu0 0
        %772 = vmatpush1.bf16.msra.mxu0 0
        %773 = vmatprep.subr.bf16.mxu0 0
        %774 = vmatpush1.bf16.msra.mxu0 0
        %775 = vmatprep.subr.bf16.mxu0 0
        %776 = vmatpush1.bf16.msra.mxu0 0
        %777 = vmatprep.subr.bf16.mxu0 0
        %778 = vmatpush1.bf16.msra.mxu0 0
        %779 = vmatprep.subr.bf16.mxu0 0
        %780 = vmatpush1.bf16.msra.mxu0 0
        %781 = vmatprep.subr.bf16.mxu0 0
        %782 = vmatpush1.bf16.msra.mxu0 0
        %783 = vmatprep.subr.bf16.mxu0 0
        %784 = vmatpush1.bf16.msra.mxu0 0
        %785 = vmatprep.subr.bf16.mxu0 0
        %786 = vmatpush1.bf16.msra.mxu0 0
        %787 = vmatprep.mubr.bf16.mxu0 0
        %788 = vmatmul.mubr.bf16.gmra.mrb[0].mxu0 %v747
        %v789 = vpop.f32.mrb[0].mxu0
        %v790 = vadd.f32 0.0, %v789
        %v791 = vpop.f32.mrb[0].mxu0
        %v792 = vadd.f32 0.0, %v791
        %v793 = vpop.f32.mrb[0].mxu0
        %v794 = vpop.f32.mrb[0].mxu0
        %795 = vdwg.mxu0
        %v796 = vadd.f32 %v715, %v790
        %v797 = vadd.f32 %v716, %v792
        %v798 = vld [vmem:[%s168] sm:$0x3f]
        %s799 = scalar_lea.vmem %s1, 32
        %v800 = vld [vmem:[%s799] sm:$0xf]
        %v802 = vcombine.high %v798, %v798
        %v804 = vunpack.c.l.s4 1983009808
        %v805 = vunpack.c.0.s8 %v804
        %v806 = vlaneseq
        %v807 = vshrl.u32 %v806, 7
        %v808 = vsub.s32 %v805, %v807
        %v809 = vrot.slane %v798, %v808
        %v811 = vunpack.c.l.s4 1983009808
        %v812 = vunpack.c.0.s8 %v811
        %v813 = vlaneseq
        %v814 = vshrl.u32 %v813, 7
        %v815 = vsub.s32 %v812, %v814
        %v816 = vrot.slane %v802, %v815
        %v817 = vcombine.high %v809, %v809
        %818 = vrot.lane.b32.xlu0 %v809, 94
        %v819 = vpop.permute.xlu0 %818
        %820 = vrot.lane.b32.xlu0 %v817, 94
        %v821 = vpop.permute.xlu0 %820
        %822 = vrot.lane.b32.xlu0 %v816, 94
        %v823 = vpop.permute.xlu0 %822
        %vm824 = vcmask 769024
        %v825 = vsel %vm824, %v819, %v821
        %v826 = vsel %vm824, %v821, %v823
        %v828 = vsel %vm201, %v800, 0
        %v831 = vsel %vm205, %v825, 0
        %v834 = vsel %vm205, %v826, 0
        %836 = vmatprep.subr.bf16.mxu0 %v834
        %837 = vmatpush1.bf16.msra.mxu0 %v831
        %838 = vmatprep.subr.bf16.mxu0 0
        %839 = vmatpush1.bf16.msra.mxu0 0
        %840 = vmatprep.subr.bf16.mxu0 0
        %841 = vmatpush1.bf16.msra.mxu0 0
        %842 = vmatprep.subr.bf16.mxu0 0
        %843 = vmatpush1.bf16.msra.mxu0 0
        %844 = vmatprep.subr.bf16.mxu0 0
        %845 = vmatpush1.bf16.msra.mxu0 0
        %846 = vmatprep.subr.bf16.mxu0 0
        %847 = vmatpush1.bf16.msra.mxu0 0
        %848 = vmatprep.subr.bf16.mxu0 0
        %849 = vmatpush1.bf16.msra.mxu0 0
        %850 = vmatprep.subr.bf16.mxu0 0
        %851 = vmatpush1.bf16.msra.mxu0 0
        %852 = vmatprep.subr.bf16.mxu0 0
        %853 = vmatpush1.bf16.msra.mxu0 0
        %854 = vmatprep.subr.bf16.mxu0 0
        %855 = vmatpush1.bf16.msra.mxu0 0
        %856 = vmatprep.subr.bf16.mxu0 0
        %857 = vmatpush1.bf16.msra.mxu0 0
        %858 = vmatprep.subr.bf16.mxu0 0
        %859 = vmatpush1.bf16.msra.mxu0 0
        %860 = vmatprep.subr.bf16.mxu0 0
        %861 = vmatpush1.bf16.msra.mxu0 0
        %862 = vmatprep.subr.bf16.mxu0 0
        %863 = vmatpush1.bf16.msra.mxu0 0
        %864 = vmatprep.subr.bf16.mxu0 0
        %865 = vmatpush1.bf16.msra.mxu0 0
        %866 = vmatprep.subr.bf16.mxu0 0
        %867 = vmatpush1.bf16.msra.mxu0 0
        %868 = vmatprep.mubr.bf16.mxu0 0
        %869 = vmatmul.mubr.bf16.gmra.mrb[0].mxu0 %v828
        %v870 = vpop.f32.mrb[0].mxu0
        %v871 = vadd.f32 0.0, %v870
        %v872 = vpop.f32.mrb[0].mxu0
        %v873 = vadd.f32 0.0, %v872
        %v874 = vpop.f32.mrb[0].mxu0
        %v875 = vpop.f32.mrb[0].mxu0
        %876 = vdwg.mxu0
        %v877 = vadd.f32 %v796, %v871
        %v878 = vadd.f32 %v797, %v873
        %v879 = vld [vmem:[%s2] sm:$0xff]
        %881 = vset.pattern.permute.xlu0 0
        %882 = vperm.xlu0 %881, %v879
        %v883 = vpop.permute.xlu0 %882
        %v885 = vadd.f32 %v877, %v883
        %v886 = vadd.f32 %v878, %v883
        %887 = vst [vmem:[%s163] sm:$0xff] %v885
        %888 = vst [vmem:[%s163 + $0x8] sm:$0xff] %v886
        %s889 = sand.u32 %s93, 1
        %s890 = scalar_lea.sflag [#allocation3], %s889
        %s891 = sand.u32 %s93, 1
        %s892 = smul.addr %s891, 16
        %s893 = scalar_lea.vmem [#allocation2], %s892
        // Predicated region
        $region33: #{tpu_custom_call.1} parent=31 // pred_check
          %p894 = pneg %p103
        $region34: #{tpu_custom_call.1} parent=31 // pred_check_branch
          %896 = sbr.rel (%p894) target = $region36
        $region35: #{tpu_custom_call.1} parent=31 // pred_region
          %s898 = ssub.s32 256, 256
          %899 = vsyncadd %s890, %s898
          %s900 = smul.addr %s17, 2
          %s901 = smul.addr %s900, 128
          %s902 = scalar_lea.hbm %s3, %s901
          %s904 = sshll.u32 %s893, 4
          %s905 = int_to_ptr.vmem [resolvable:$true] %s904
          %907 = dma.vmem_to_hbm [thread:$0]  %s905, 256, %s902, %s890
        $region36: #{tpu_custom_call.1} parent=31 // pred_fallthru
          _
      $region32: #{tpu_custom_call.1} parent=5 // pred_fallthru
        _
      %p908 = scmp.le.s32.totalorder 2, %s12
      // Predicated region
      $region37: #{tpu_custom_call.1} parent=5 // pred_check
        %p909 = pneg %p908
      $region38: #{tpu_custom_call.1} parent=5 // pred_check_branch
        %911 = sbr.rel (%p909) target = $region40
      $region39: #{tpu_custom_call.1} parent=5 // pred_region
        %s912 = ssub.s32 %s12, 2
        // Predicated region
        $region41: #{tpu_custom_call.1} parent=39 // pred_check
          %p913 = pneg %p109
        $region42: #{tpu_custom_call.1} parent=39 // pred_check_branch
          %915 = sbr.rel (%p913) target = $region44
        $region43: #{tpu_custom_call.1} parent=39 // pred_region
          %s916 = sand.u32 %s94, 1
          %s917 = scalar_lea.sflag [#allocation3], %s916
          %s918 = sand.u32 %s94, 1
          %s919 = smul.addr %s918, 16
          %s920 = scalar_lea.vmem [#allocation2], %s919
          %921 = dma.done %s917, 256
        $region44: #{tpu_custom_call.1} parent=39 // pred_fallthru
          _
      $region40: #{tpu_custom_call.1} parent=5 // pred_fallthru
        _
    $region6: #{tpu_custom_call.1} parent=1 // loop_footer
      %s16 = sadd.s32 1, %s12
    $region7: #{tpu_custom_call.1} parent=1 // loop_footer_branch
      %11 = sbr.rel target = $region3
    $region8: #{tpu_custom_call.1} parent=1 // loop_exit
      _
    %922 = vsyncpa [#allocation3], 1
    %s923 = scalar_lea.sflag [#allocation3], 1
    %924 = vsyncpa %s923, 1

</llo_original>
